<compile_context>
chip_gen: v6e
topology: v6e:2x2x1
jax: 0.10.0
libtpu: 0.0.40
codegen_flags: <defaults>
</compile_context>

<pallas_src>
import jax
import jax.numpy as jnp
from jax.experimental import pallas as pl
from jax.experimental.pallas import tpu as pltpu


def _round_up(x, m):
    return ((x + m - 1) // m) * m


def _timestep_embed_kernel(x_ref, w1_ref, b1_ref, w2_ref, b2_ref, o_ref):
    # Linear 1 + exact GELU in f32.  Recomputed per column tile in the (rare)
    # column-tiled case; normally the column grid has extent 1 so this runs once.
    h = jnp.dot(x_ref[...], w1_ref[...], preferred_element_type=jnp.float32)
    h = h + b1_ref[...].astype(jnp.float32)
    # Exact GELU (matches torch.nn.GELU() default, approximate='none'):
    #   gelu(x) = 0.5 * x * (1 + erf(x / sqrt(2)))   -- erf runs on the EUP.
    inv_sqrt2 = jnp.float32(0.7071067811865476)
    h = 0.5 * h * (1.0 + jax.lax.erf(h * inv_sqrt2))

    # Linear 2 on the current output slab: [tb, D] @ [D, tn] + [1, tn].
    # Single cast to the weight dtype keeps the native-dtype MXU path.
    o = jnp.dot(h.astype(w2_ref.dtype), w2_ref[...],
                preferred_element_type=jnp.float32)
    o = o + b2_ref[...].astype(jnp.float32)
    o_ref[...] = o.astype(o_ref.dtype)


def _vmem_budget_bytes():
    # Generation-aware scoped-VMEM budget with ~25% headroom for compiler
    # scratch.  Fallback of 48 MiB is safe on every generation (v7x physical
    # VMEM is 64 MiB; v5e/v6e have 128 MiB but default scoped limits of 16/32).
    try:
        return int(pltpu.get_tpu_info().vmem_capacity_bytes) * 3 // 4
    except Exception:
        return 48 << 20


def timestep_embed(sample, w1, b1, w2, b2, *, tb_max=256):
    """sample: [B, in_dim]; w1: [in_dim, D]; b1: [1, D]; w2: [D, D]; b2: [1, D]."""
    B, in_dim = sample.shape
    D = w1.shape[1]
    assert w1.shape == (in_dim, D) and w2.shape == (D, D)
    assert b1.shape == (1, D) and b2.shape == (1, D)

    x_item = sample.dtype.itemsize
    w_item = w2.dtype.itemsize
    budget = _vmem_budget_bytes()

    # ---- batch tile: full batch when small, otherwise a multiple of 8. ----
    if B <= 8:
        tb = B                                  # block == full dim (always legal)
    else:
        tb = min(_round_up(B, 8), tb_max)

    # ---- column tile: keep w2 fully VMEM-resident unless it cannot fit. ----
    def _fits(tn_):
        # Conservative: assume double-buffering of every operand.
        need = 2 * (tb * in_dim * x_item                # x tile
                    + in_dim * D * w1.dtype.itemsize    # w1 (resident)
                    + D * b1.dtype.itemsize             # b1 (resident)
                    + D * tn_ * w_item                  # w2 slab
                    + tn_ * b2.dtype.itemsize           # b2 slab
                    + tb * tn_ * x_item)                # out tile
        return need <= budget

    if _fits(D) or D % 128 != 0:
        tn = D                                  # fully resident w2 -> grid (nbt, 1)
    else:
        tn = (D // 128) * 128                   # lane-dense, unmasked output stores
        while tn > 128 and not _fits(tn):
            tn -= 128
        tn = max(tn, 128)

    nbt, ncol = pl.cdiv(B, tb), pl.cdiv(D, tn)

    # v7x megacore: if the whole problem would be a single grid step, split the
    # batch across the two TensorCores (no effect on single-TC v5e/v6e).
    if nbt == 1 and ncol == 1 and B >= 16:
        tb = _round_up((B + 1) // 2, 8)
        nbt = pl.cdiv(B, tb)

    grid = (nbt, ncol)

    # w2/b2 are read once when resident (constant index_map); when column-tiled
    # with the column axis innermost they are re-streamed once per batch tile.
    w2_passes = 1 if ncol == 1 else nbt
    cost = pl.CostEstimate(
        flops=2 * B * in_dim * D * ncol + 2 * B * D * D,
        transcendentals=B * D * ncol,           # erf per hidden activation
        bytes_accessed=(sample.size * x_item
                        + w1.size * w1.dtype.itemsize
                        + b1.size * b1.dtype.itemsize
                        + w2.size * w_item * w2_passes
                        + b2.size * b2.dtype.itemsize * w2_passes
                        + B * D * x_item),
    )

    return pl.pallas_call(
        _timestep_embed_kernel,
        out_shape=jax.ShapeDtypeStruct((B, D), sample.dtype),
        grid_spec=pltpu.PrefetchScalarGridSpec(
            num_scalar_prefetch=0,
            grid=grid,
            in_specs=[
                pl.BlockSpec((tb, in_dim), lambda i, j: (i, 0)),   # x: batch tile
                pl.BlockSpec((in_dim, D), lambda i, j: (0, 0)),    # w1: resident
                pl.BlockSpec((1, D), lambda i, j: (0, 0)),         # b1: resident
                pl.BlockSpec((D, tn), lambda i, j: (0, j)),        # w2: resident slab
                pl.BlockSpec((1, tn), lambda i, j: (0, j)),        # b2: resident slab
            ],
            out_specs=pl.BlockSpec((tb, tn), lambda i, j: (i, j)),
        ),
        compiler_params=pltpu.CompilerParams(
            dimension_semantics=("parallel", "parallel"),
            vmem_limit_bytes=budget,
        ),
        cost_estimate=cost,
    )(sample, w1, b1, w2, b2)


def _reference(sample, w1, b1, w2, b2):
    h = sample.astype(jnp.float32) @ w1.astype(jnp.float32) + b1.astype(jnp.float32)
    h = 0.5 * h * (1.0 + jax.lax.erf(h * jnp.float32(0.7071067811865476)))
    o = h @ w2.astype(jnp.float32) + b2.astype(jnp.float32)
    return o.astype(sample.dtype)


if __name__ == "__main__":
    # Small shapes consistent with the module: batch=8, in_dim=32, time_emb_dim=128.
    B, in_dim, time_emb_dim = 8, 32, 128

    key = jax.random.PRNGKey(0)
    k_x, k_w1, k_b1, k_w2, k_b2 = jax.random.split(key, 5)

    # Deterministic synthetic parameters (nn.Linear shapes, stored as [in, out]).
    sample = jax.random.normal(k_x, (B, in_dim), dtype=jnp.float32)
    w1 = jax.random.normal(k_w1, (in_dim, time_emb_dim), dtype=jnp.float32) * (1.0 / jnp.sqrt(in_dim))
    b1 = jax.random.normal(k_b1, (1, time_emb_dim), dtype=jnp.float32) * 0.02
    w2 = jax.random.normal(k_w2, (time_emb_dim, time_emb_dim), dtype=jnp.float32) * (1.0 / jnp.sqrt(time_emb_dim))
    b2 = jax.random.normal(k_b2, (1, time_emb_dim), dtype=jnp.float32) * 0.02

    out = jax.block_until_ready(timestep_embed(sample, w1, b1, w2, b2))
    ref = jax.block_until_ready(_reference(sample, w1, b1, w2, b2))

    assert out.shape == (B, time_emb_dim)
    assert jnp.allclose(out, ref, atol=1e-4, rtol=1e-4)

    print("KERNEL_OK")
</pallas_src>

<mosaic_0001>
module attributes {stable_mosaic.version = 11 : i64} {
  func.func @_timestep_embed_kernel(%arg0: i32, %arg1: i32, %arg2: memref<8x32xf32, #tpu.memory_space<vmem>>, %arg3: memref<32x128xf32, #tpu.memory_space<vmem>>, %arg4: memref<1x128xf32, #tpu.memory_space<vmem>>, %arg5: memref<128x128xf32, #tpu.memory_space<vmem>>, %arg6: memref<1x128xf32, #tpu.memory_space<vmem>>, %arg7: memref<8x128xf32, #tpu.memory_space<vmem>>) attributes {dimension_semantics = [#tpu.dimension_semantics<parallel>, #tpu.dimension_semantics<parallel>], iteration_bounds = array<i64: 1, 1>, scalar_prefetch = 0 : i64, scratch_operands = 0 : i64, tpu.core_type = #tpu.core_type<tc>, window_params = [{transform_indices = @transform_0, window_bounds = array<i64: 8, 32>}, {pipeline_mode = #tpu.pipeline_mode<synchronous>, transform_indices = @transform_1, window_bounds = array<i64: 32, 128>}, {pipeline_mode = #tpu.pipeline_mode<synchronous>, transform_indices = @transform_2, window_bounds = array<i64: 1, 128>}, {transform_indices = @transform_3, window_bounds = array<i64: 128, 128>}, {transform_indices = @transform_4, window_bounds = array<i64: 1, 128>}, {transform_indices = @transform_5, window_bounds = array<i64: 8, 128>}]} {
    %c0 = arith.constant 0 : index
    %c0_0 = arith.constant 0 : index
    %0 = vector.load %arg2[%c0, %c0_0] : memref<8x32xf32, #tpu.memory_space<vmem>>, vector<8x32xf32>
    %c0_1 = arith.constant 0 : index
    %c0_2 = arith.constant 0 : index
    %1 = vector.load %arg3[%c0_1, %c0_2] : memref<32x128xf32, #tpu.memory_space<vmem>>, vector<32x128xf32>
    %cst = arith.constant dense<0.000000e+00> : vector<8x128xf32>
    %2 = tpu.matmul %0, %1, %cst {dimension_numbers = #tpu.dot_dimension_numbers<[1], [0], [0], [1], [0, 0, 1, 1], [], []>} : vector<8x32xf32>, vector<32x128xf32>, vector<8x128xf32> -> vector<8x128xf32>
    %c0_3 = arith.constant 0 : index
    %c0_4 = arith.constant 0 : index
    %3 = vector.load %arg4[%c0_3, %c0_4] : memref<1x128xf32, #tpu.memory_space<vmem>>, vector<1x128xf32>
    %4 = vector.broadcast %3 : vector<1x128xf32> to vector<8x128xf32>
    %5 = arith.addf %2, %4 : vector<8x128xf32>
    %cst_5 = arith.constant 5.000000e-01 : f32
    %6 = vector.broadcast %cst_5 : f32 to vector<8x128xf32>
    %7 = arith.mulf %6, %5 : vector<8x128xf32>
    %cst_6 = arith.constant 0.707106769 : f32
    %8 = vector.broadcast %cst_6 : f32 to vector<8x128xf32>
    %9 = arith.mulf %5, %8 : vector<8x128xf32>
    %10 = math.erf %9 : vector<8x128xf32>
    %cst_7 = arith.constant 1.000000e+00 : f32
    %11 = vector.broadcast %cst_7 : f32 to vector<8x128xf32>
    %12 = arith.addf %11, %10 : vector<8x128xf32>
    %13 = arith.mulf %7, %12 : vector<8x128xf32>
    %c0_8 = arith.constant 0 : index
    %c0_9 = arith.constant 0 : index
    %14 = vector.load %arg5[%c0_8, %c0_9] : memref<128x128xf32, #tpu.memory_space<vmem>>, vector<128x128xf32>
    %cst_10 = arith.constant dense<0.000000e+00> : vector<8x128xf32>
    %15 = tpu.matmul %13, %14, %cst_10 {dimension_numbers = #tpu.dot_dimension_numbers<[1], [0], [0], [1], [0, 0, 1, 1], [], []>} : vector<8x128xf32>, vector<128x128xf32>, vector<8x128xf32> -> vector<8x128xf32>
    %c0_11 = arith.constant 0 : index
    %c0_12 = arith.constant 0 : index
    %16 = vector.load %arg6[%c0_11, %c0_12] : memref<1x128xf32, #tpu.memory_space<vmem>>, vector<1x128xf32>
    %17 = vector.broadcast %16 : vector<1x128xf32> to vector<8x128xf32>
    %18 = arith.addf %15, %17 : vector<8x128xf32>
    %c0_13 = arith.constant 0 : index
    %c0_14 = arith.constant 0 : index
    %19 = vector.load %arg7[%c0_13, %c0_14] : memref<8x128xf32, #tpu.memory_space<vmem>>, vector<8x128xf32>
    tpu.vector_store %arg7[%c0_13, %c0_14], %18 {strides = array<i32>} : memref<8x128xf32, #tpu.memory_space<vmem>>, vector<8x128xf32>,
    return
  }
  func.func @transform_0(%arg0: i32, %arg1: i32) -> (i32, i32) {
    %c0_i32 = arith.constant 0 : i32
    %c0_i32_0 = arith.constant 0 : i32
    return %arg0, %c0_i32 : i32, i32
  }
  func.func @transform_1(%arg0: i32, %arg1: i32) -> (i32, i32) {
    %c0_i32 = arith.constant 0 : i32
    %c0_i32_0 = arith.constant 0 : i32
    %c0_i32_1 = arith.constant 0 : i32
    return %c0_i32, %c0_i32_0 : i32, i32
  }
  func.func @transform_2(%arg0: i32, %arg1: i32) -> (i32, i32) {
    %c0_i32 = arith.constant 0 : i32
    %c0_i32_0 = arith.constant 0 : i32
    %c0_i32_1 = arith.constant 0 : i32
    return %c0_i32, %c0_i32_0 : i32, i32
  }
  func.func @transform_3(%arg0: i32, %arg1: i32) -> (i32, i32) {
    %c0_i32 = arith.constant 0 : i32
    %c0_i32_0 = arith.constant 0 : i32
    return %c0_i32, %arg1 : i32, i32
  }
  func.func @transform_4(%arg0: i32, %arg1: i32) -> (i32, i32) {
    %c0_i32 = arith.constant 0 : i32
    %c0_i32_0 = arith.constant 0 : i32
    return %c0_i32, %arg1 : i32, i32
  }
  func.func @transform_5(%arg0: i32, %arg1: i32) -> (i32, i32) {
    %c0_i32 = arith.constant 0 : i32
    return %arg0, %arg1 : i32, i32
  }
}

</mosaic_0001>

<llo_original>
// kernel: tpu_custom_call.1
$region0: #{tpu_custom_call.1}
  #allocation0 [shape = 'u32[]', space=smem, size = 0x4, offset = 0x4, fixed_abs, tag = 'smem constant byte address 0x4 - core index']
  #allocation1 [shape = 'u32[144,128]{1,0:T(1,128)}', space=vmem, size = 0x12000, scoped, tag = 'internal scratch']
  %s0 = inlined_call_operand.hbm [shape: f32[8,32], index: 0, kind: input, shape index: {}]
  %s1 = inlined_call_operand.hbm [shape: f32[32,128], index: 1, kind: input, shape index: {}]
  %s2 = inlined_call_operand.vmem [shape: f32[1,128], index: 2, kind: input, shape index: {}]
  %s3 = inlined_call_operand.hbm [shape: f32[128,128], index: 3, kind: input, shape index: {}]
  %s4 = inlined_call_operand.vmem [shape: f32[1,128], index: 4, kind: input, shape index: {}]
  %s5 = inlined_call_operand.hbm [shape: f32[8,128], index: 5, kind: output, shape index: {}]
  %s6 = sld [smem:[#allocation0]]
  $region42: #{tpu_custom_call.1} parent=0
    _
  %s8 = ssub.s32 1, %s6
  %s9 = scalar_select 0, %s8, %s6
  $region1: #{tpu_custom_call.1} parent=0
    #allocation2 [shape = 'u8[4096]{0}', space=vmem, size = 0x1000, scoped, tag = 'input window, operand 0, single buffered']
    #allocation3 [shape = 's32[1]{0}', space=sflag, size = 0x4, scoped, tag = 'scoped memory for tpu_custom_call.1']
    #allocation4 [shape = 's32[1]{0}', space=sflag, size = 0x4, scoped, tag = 'scoped memory for tpu_custom_call.1']
    #allocation5 [shape = 'u8[16384]{0}', space=vmem, size = 0x4000, scoped, tag = 'input window, operand 1, single buffered']
    #allocation6 [shape = 's32[1]{0}', space=sflag, size = 0x4, scoped, tag = 'scoped memory for tpu_custom_call.1']
    #allocation7 [shape = 'u8[65536]{0}', space=vmem, size = 0x10000, scoped, tag = 'input window, operand 3, single buffered']
    #allocation8 [shape = 'u8[4096]{0}', space=vmem, size = 0x1000, scoped, tag = 'output window, operand 0, single buffered']
    %10 = vsyncpa [#allocation3], 0
    %11 = vsyncpa [#allocation6], 0
    %12 = vsyncpa [#allocation4], 0
    // Predicated region
    $region2: #{tpu_custom_call.1} parent=1 // pred_check
      _
    $region3: #{tpu_custom_call.1} parent=1 // pred_check_branch
      %14 = sbr.rel (0) target = $region5
    $region4: #{tpu_custom_call.1} parent=1 // pred_region
      %s16 = ssub.s32 128, 128
      %17 = vsyncadd [#allocation3], %s16
      %s19 = sshll.u32 [#allocation2], 4
      %s20 = int_to_ptr.vmem [resolvable:$true] %s19
      %22 = dma.hbm_to_vmem [thread:$0]  %s0, 128, %s20, [#allocation3]
    $region5: #{tpu_custom_call.1} parent=1 // pred_fallthru
      _
    // Predicated region
    $region6: #{tpu_custom_call.1} parent=1 // pred_check
      _
    $region7: #{tpu_custom_call.1} parent=1 // pred_check_branch
      %24 = sbr.rel (0) target = $region9
    $region8: #{tpu_custom_call.1} parent=1 // pred_region
      %s26 = ssub.s32 512, 512
      %27 = vsyncadd [#allocation6], %s26
      %s28 = sshll.u32 [#allocation5], 4
      %s29 = int_to_ptr.vmem [resolvable:$true] %s28
      %34 = dma.hbm_to_vmem [thread:$0]  %s1, 512, %s29, [#allocation6], 128, 128, 8
    $region9: #{tpu_custom_call.1} parent=1 // pred_fallthru
      _
    // Predicated region
    $region10: #{tpu_custom_call.1} parent=1 // pred_check
      _
    $region11: #{tpu_custom_call.1} parent=1 // pred_check_branch
      %36 = sbr.rel (0) target = $region13
    $region12: #{tpu_custom_call.1} parent=1 // pred_region
      _
    $region13: #{tpu_custom_call.1} parent=1 // pred_fallthru
      _
    // Predicated region
    $region14: #{tpu_custom_call.1} parent=1 // pred_check
      _
    $region15: #{tpu_custom_call.1} parent=1 // pred_check_branch
      %38 = sbr.rel (0) target = $region17
    $region16: #{tpu_custom_call.1} parent=1 // pred_region
      %s40 = ssub.s32 2048, 2048
      %41 = vsyncadd [#allocation6], %s40
      %s42 = sshll.u32 [#allocation7], 4
      %s43 = int_to_ptr.vmem [resolvable:$true] %s42
      %48 = dma.hbm_to_vmem [thread:$0]  %s3, 2048, %s43, [#allocation6], 128, 128, 8
    $region17: #{tpu_custom_call.1} parent=1 // pred_fallthru
      _
    // Predicated region
    $region18: #{tpu_custom_call.1} parent=1 // pred_check
      _
    $region19: #{tpu_custom_call.1} parent=1 // pred_check_branch
      %50 = sbr.rel (0) target = $region21
    $region20: #{tpu_custom_call.1} parent=1 // pred_region
      _
    $region21: #{tpu_custom_call.1} parent=1 // pred_fallthru
      _
    // Predicated region
    $region22: #{tpu_custom_call.1} parent=1 // pred_check
      _
    $region23: #{tpu_custom_call.1} parent=1 // pred_check_branch
      %52 = sbr.rel (0) target = $region25
    $region24: #{tpu_custom_call.1} parent=1 // pred_region
      %53 = dma.done [#allocation3], 128
    $region25: #{tpu_custom_call.1} parent=1 // pred_fallthru
      _
    // Predicated region
    $region26: #{tpu_custom_call.1} parent=1 // pred_check
      _
    $region27: #{tpu_custom_call.1} parent=1 // pred_check_branch
      %55 = sbr.rel (0) target = $region29
    $region28: #{tpu_custom_call.1} parent=1 // pred_region
      %56 = dma.done [#allocation6], 512
    $region29: #{tpu_custom_call.1} parent=1 // pred_fallthru
      _
    // Predicated region
    $region30: #{tpu_custom_call.1} parent=1 // pred_check
      _
    $region31: #{tpu_custom_call.1} parent=1 // pred_check_branch
      %58 = sbr.rel (0) target = $region33
    $region32: #{tpu_custom_call.1} parent=1 // pred_region
      %59 = dma.done [#allocation6], 2048
    $region33: #{tpu_custom_call.1} parent=1 // pred_fallthru
      _
    %v60 = vld [vmem:[#allocation2] sm:$0xff]
    %v61 = vld [vmem:[#allocation5] sm:$0xff]
    %v62 = vld [vmem:[#allocation5 + $0x8] sm:$0xff]
    %v63 = vld [vmem:[#allocation5 + $0x10] sm:$0xff]
    %v64 = vld [vmem:[#allocation5 + $0x18] sm:$0xff]
    %v65 = vld [vmem:[%s2] sm:$0x1]
    %v67 = vlaneseq
    %v68 = vshrl.u32 %v67, 7
    %v69 = vsub.s32 0, %v68
    %v70 = vrot.slane %v65, %v69
    %vm72 = vcmask 261120
    %v74 = vsel %vm72, %v60, 0
    %76 = vmatprep.subr.mxu0 0.0
    %77 = vmatpush1.msra.mxu0 0.0
    %78 = vmatprep.subr.mxu0 0.0
    %79 = vmatpush1.msra.mxu0 0.0
    %80 = vmatprep.subr.mxu0 0.0
    %81 = vmatpush1.msra.mxu0 0.0
    %82 = vmatprep.subr.mxu0 0.0
    %83 = vmatpush1.msra.mxu0 0.0
    %84 = vmatprep.subr.mxu0 0.0
    %85 = vmatpush1.msra.mxu0 0.0
    %86 = vmatprep.subr.mxu0 0.0
    %87 = vmatpush1.msra.mxu0 0.0
    %88 = vmatprep.subr.mxu0 0.0
    %89 = vmatpush1.msra.mxu0 0.0
    %90 = vmatprep.subr.mxu0 0.0
    %91 = vmatpush1.msra.mxu0 0.0
    %92 = vmatprep.subr.mxu0 0.0
    %93 = vmatpush1.msra.mxu0 0.0
    %94 = vmatprep.subr.mxu0 0.0
    %95 = vmatpush1.msra.mxu0 0.0
    %96 = vmatprep.subr.mxu0 0.0
    %97 = vmatpush1.msra.mxu0 0.0
    %98 = vmatprep.subr.mxu0 0.0
    %99 = vmatpush1.msra.mxu0 0.0
    %100 = vmatprep.subr.mxu0 0.0
    %101 = vmatpush1.msra.mxu0 %v64
    %102 = vmatprep.subr.mxu0 0.0
    %103 = vmatpush1.msra.mxu0 %v63
    %104 = vmatprep.subr.mxu0 0.0
    %105 = vmatpush1.msra.mxu0 %v62
    %106 = vmatprep.subr.mxu0 0.0
    %107 = vmatpush1.msra.mxu0 %v61
    %108 = vmatprep.subr.mxu0 0.0
    %109 = vmatpush2.msra.mxu0 0.0
    %110 = vmatprep.subr.mxu0 0.0
    %111 = vmatpush2.msra.mxu0 0.0
    %112 = vmatprep.subr.mxu0 0.0
    %113 = vmatpush2.msra.mxu0 0.0
    %114 = vmatprep.subr.mxu0 0.0
    %115 = vmatpush2.msra.mxu0 0.0
    %116 = vmatprep.subr.mxu0 0.0
    %117 = vmatpush2.msra.mxu0 0.0
    %118 = vmatprep.subr.mxu0 0.0
    %119 = vmatpush2.msra.mxu0 0.0
    %120 = vmatprep.subr.mxu0 0.0
    %121 = vmatpush2.msra.mxu0 0.0
    %122 = vmatprep.subr.mxu0 0.0
    %123 = vmatpush2.msra.mxu0 0.0
    %124 = vmatprep.subr.mxu0 0.0
    %125 = vmatpush2.msra.mxu0 0.0
    %126 = vmatprep.subr.mxu0 0.0
    %127 = vmatpush2.msra.mxu0 0.0
    %128 = vmatprep.subr.mxu0 0.0
    %129 = vmatpush2.msra.mxu0 0.0
    %130 = vmatprep.subr.mxu0 0.0
    %131 = vmatpush2.msra.mxu0 0.0
    %132 = vmatprep.subr.mxu0 0.0
    %133 = vmatpush2.msra.mxu0 0.0
    %134 = vmatprep.subr.mxu0 0.0
    %135 = vmatpush2.msra.mxu0 0.0
    %136 = vmatprep.subr.mxu0 0.0
    %137 = vmatpush2.msra.mxu0 0.0
    %138 = vmatprep.subr.mxu0 0.0
    %139 = vmatpush2.msra.mxu0 0.0
    %140 = vmatprep.mubr.f32.mxu0 0.0
    %141 = vmatmul.mubr.f32.gmra.mxu0 %v74
    %v142 = vpop.f32.mrf.mxu0
    %v143 = vadd.f32 %v70, %v142
    %v144 = vpop.f32.mrf.mxu0
    %145 = vdwg.mxu0
    %v146 = vmul.f32 %v143, 0.5
    %v147 = vmul.f32 %v143, 0.70710677
    %v148 = verf.f32.pop %v147
    %v149 = vadd.f32 %v148, 1.0
    %v150 = vmul.f32 %v146, %v149
    %v151 = vld [vmem:[#allocation7] sm:$0xff]
    %v152 = vld [vmem:[#allocation7 + $0x8] sm:$0xff]
    %v153 = vld [vmem:[#allocation7 + $0x10] sm:$0xff]
    %v154 = vld [vmem:[#allocation7 + $0x18] sm:$0xff]
    %v155 = vld [vmem:[#allocation7 + $0x20] sm:$0xff]
    %v156 = vld [vmem:[#allocation7 + $0x28] sm:$0xff]
    %v157 = vld [vmem:[#allocation7 + $0x30] sm:$0xff]
    %v158 = vld [vmem:[#allocation7 + $0x38] sm:$0xff]
    %v159 = vld [vmem:[#allocation7 + $0x40] sm:$0xff]
    %v160 = vld [vmem:[#allocation7 + $0x48] sm:$0xff]
    %v161 = vld [vmem:[#allocation7 + $0x50] sm:$0xff]
    %v162 = vld [vmem:[#allocation7 + $0x58] sm:$0xff]
    %v163 = vld [vmem:[#allocation7 + $0x60] sm:$0xff]
    %v164 = vld [vmem:[#allocation7 + $0x68] sm:$0xff]
    %v165 = vld [vmem:[#allocation7 + $0x70] sm:$0xff]
    %v166 = vld [vmem:[#allocation7 + $0x78] sm:$0xff]
    %v167 = vld [vmem:[%s4] sm:$0x1]
    %v169 = vlaneseq
    %v170 = vshrl.u32 %v169, 7
    %v171 = vsub.s32 0, %v170
    %v172 = vrot.slane %v167, %v171
    %174 = vmatprep.subr.mxu0 0.0
    %175 = vmatpush1.msra.mxu0 %v166
    %176 = vmatprep.subr.mxu0 0.0
    %177 = vmatpush1.msra.mxu0 %v165
    %178 = vmatprep.subr.mxu0 0.0
    %179 = vmatpush1.msra.mxu0 %v164
    %180 = vmatprep.subr.mxu0 0.0
    %181 = vmatpush1.msra.mxu0 %v163
    %182 = vmatprep.subr.mxu0 0.0
    %183 = vmatpush1.msra.mxu0 %v162
    %184 = vmatprep.subr.mxu0 0.0
    %185 = vmatpush1.msra.mxu0 %v161
    %186 = vmatprep.subr.mxu0 0.0
    %187 = vmatpush1.msra.mxu0 %v160
    %188 = vmatprep.subr.mxu0 0.0
    %189 = vmatpush1.msra.mxu0 %v159
    %190 = vmatprep.subr.mxu0 0.0
    %191 = vmatpush1.msra.mxu0 %v158
    %192 = vmatprep.subr.mxu0 0.0
    %193 = vmatpush1.msra.mxu0 %v157
    %194 = vmatprep.subr.mxu0 0.0
    %195 = vmatpush1.msra.mxu0 %v156
    %196 = vmatprep.subr.mxu0 0.0
    %197 = vmatpush1.msra.mxu0 %v155
    %198 = vmatprep.subr.mxu0 0.0
    %199 = vmatpush1.msra.mxu0 %v154
    %200 = vmatprep.subr.mxu0 0.0
    %201 = vmatpush1.msra.mxu0 %v153
    %202 = vmatprep.subr.mxu0 0.0
    %203 = vmatpush1.msra.mxu0 %v152
    %204 = vmatprep.subr.mxu0 0.0
    %205 = vmatpush1.msra.mxu0 %v151
    %206 = vmatprep.subr.mxu0 0.0
    %207 = vmatpush2.msra.mxu0 0.0
    %208 = vmatprep.subr.mxu0 0.0
    %209 = vmatpush2.msra.mxu0 0.0
    %210 = vmatprep.subr.mxu0 0.0
    %211 = vmatpush2.msra.mxu0 0.0
    %212 = vmatprep.subr.mxu0 0.0
    %213 = vmatpush2.msra.mxu0 0.0
    %214 = vmatprep.subr.mxu0 0.0
    %215 = vmatpush2.msra.mxu0 0.0
    %216 = vmatprep.subr.mxu0 0.0
    %217 = vmatpush2.msra.mxu0 0.0
    %218 = vmatprep.subr.mxu0 0.0
    %219 = vmatpush2.msra.mxu0 0.0
    %220 = vmatprep.subr.mxu0 0.0
    %221 = vmatpush2.msra.mxu0 0.0
    %222 = vmatprep.subr.mxu0 0.0
    %223 = vmatpush2.msra.mxu0 0.0
    %224 = vmatprep.subr.mxu0 0.0
    %225 = vmatpush2.msra.mxu0 0.0
    %226 = vmatprep.subr.mxu0 0.0
    %227 = vmatpush2.msra.mxu0 0.0
    %228 = vmatprep.subr.mxu0 0.0
    %229 = vmatpush2.msra.mxu0 0.0
    %230 = vmatprep.subr.mxu0 0.0
    %231 = vmatpush2.msra.mxu0 0.0
    %232 = vmatprep.subr.mxu0 0.0
    %233 = vmatpush2.msra.mxu0 0.0
    %234 = vmatprep.subr.mxu0 0.0
    %235 = vmatpush2.msra.mxu0 0.0
    %236 = vmatprep.subr.mxu0 0.0
    %237 = vmatpush2.msra.mxu0 0.0
    %238 = vmatprep.mubr.f32.mxu0 0.0
    %239 = vmatmul.mubr.f32.gmra.mxu0 %v150
    %v240 = vpop.f32.mrf.mxu0
    %v241 = vadd.f32 %v172, %v240
    %v242 = vpop.f32.mrf.mxu0
    %243 = vdwg.mxu0
    %244 = vst [vmem:[#allocation8] sm:$0xff] %v241
    // Predicated region
    $region34: #{tpu_custom_call.1} parent=1 // pred_check
      _
    $region35: #{tpu_custom_call.1} parent=1 // pred_check_branch
      %246 = sbr.rel (0) target = $region37
    $region36: #{tpu_custom_call.1} parent=1 // pred_region
      %s248 = ssub.s32 128, 128
      %249 = vsyncadd [#allocation4], %s248
      %s251 = sshll.u32 [#allocation8], 4
      %s252 = int_to_ptr.vmem [resolvable:$true] %s251
      %254 = dma.vmem_to_hbm [thread:$0]  %s252, 128, %s5, [#allocation4]
    $region37: #{tpu_custom_call.1} parent=1 // pred_fallthru
      _
    // Predicated region
    $region38: #{tpu_custom_call.1} parent=1 // pred_check
      _
    $region39: #{tpu_custom_call.1} parent=1 // pred_check_branch
      %256 = sbr.rel (0) target = $region41
    $region40: #{tpu_custom_call.1} parent=1 // pred_region
      %257 = dma.done [#allocation4], 128
    $region41: #{tpu_custom_call.1} parent=1 // pred_fallthru
      _
    %258 = vsyncpa [#allocation3], 1
    %259 = vsyncpa [#allocation6], 1
    %260 = vsyncpa [#allocation4], 1

</llo_original>
